<compile_context>
chip_gen: v7x
topology: tpu7x:2x2x1
jax: 0.10.0
libtpu: 0.0.40
codegen_flags: <defaults>
</compile_context>

<pallas_src>
import numpy as np

import jax
import jax.numpy as jnp
from jax import lax
from jax.experimental import pallas as pl
from jax.experimental.pallas import tpu as pltpu

# ----------------------------- problem sizes -------------------------------
N = 2                    # batch
CIN = 4                  # input channels
H = W = 16               # spatial
KH = KW = 3              # conv kernel
NUM_FEATURES = 32
NUM_CLASSES = 8

M = N * H * W            # 512 : im2col columns (whole batch folded in)
KK = KH * KW * CIN       # 36  : im2col contraction dim
N_PAD = 8                # batch rows padded to a full sublane group
C_PAD = 128              # classes padded to a full lane group

# Per-batch global-average-pool matrix, built once with numpy (baked into the
# executable as a constant). Row b holds 1/(H*W) = 1/256 (exact in bf16) on
# the 256 columns belonging to batch b; padding rows 2..7 are zero.
_POOL_NP = np.kron(np.eye(N_PAD, N, dtype=np.float32),
                   np.full((1, H * W), 1.0 / (H * W), dtype=np.float32))
POOL = jnp.asarray(_POOL_NP, dtype=jnp.bfloat16)             # (N_PAD, M)


# ------------------------------- kernel ------------------------------------
def chest_kernel(pt_ref, cw_ref, cb_ref, pool_ref, fw_ref, fb_ref, o_ref):
    # pt_ref   : (KK, M)        bf16  im2col patches, transposed (M on lanes)
    # cw_ref   : (F, KK)        bf16  conv weight, (kh, kw, cin) along columns
    # cb_ref   : (F, 1)         f32   conv bias (lane-broadcast)
    # pool_ref : (N_PAD, M)     bf16  per-batch averaging matrix (1/256, exact)
    # fw_ref   : (F, C_PAD)     bf16  fc weight, classes zero-padded to 128
    # fb_ref   : (1, C_PAD)     f32   fc bias, zero-padded
    # o_ref    : (N_PAD, C_PAD) f32   padded logits (unmasked lane-dense store)

    # 3x3 conv over the whole batch: one MXU matmul, f32 accumulation.
    # Result featT is (32, 512): 16 fully-occupied f32 vregs.
    convT = jnp.dot(cw_ref[...], pt_ref[...],
                    preferred_element_type=jnp.float32)          # (F, M)
    # Bias + ReLU in f32 (v5e-safe elementwise; fine on v6e/v7x too).
    featT = jnp.maximum(convT + cb_ref[...], 0.0)                # (F, M)

    # Global average pool as one bf16 MXU matmul, contracting the M (lane)
    # dim of both operands: pooled = pool @ featT.T.
    pooled = lax.dot_general(pool_ref[...], featT.astype(jnp.bfloat16),
                             dimension_numbers=(((1,), (1,)), ((), ())),
                             preferred_element_type=jnp.float32)  # (N_PAD, F)

    # Linear classifier head; single unmasked (8, 128) f32 store.
    logits = jnp.dot(pooled.astype(jnp.bfloat16), fw_ref[...],
                     preferred_element_type=jnp.float32) + fb_ref[...]
    o_ref[...] = logits


_VMEM_SPEC = pl.BlockSpec(memory_space=pltpu.MemorySpace.VMEM)

_COST = pl.CostEstimate(
    flops=(2 * NUM_FEATURES * KK * M            # conv matmul
           + 2 * N_PAD * M * NUM_FEATURES       # pooling matmul
           + 2 * N_PAD * NUM_FEATURES * C_PAD), # fc matmul
    transcendentals=0,
    bytes_accessed=(KK * M * 2 + NUM_FEATURES * KK * 2 + NUM_FEATURES * 4
                    + N_PAD * M * 2 + NUM_FEATURES * C_PAD * 2 + C_PAD * 4
                    + N_PAD * C_PAD * 4),
)


# --------------------------- static weight prep ------------------------------
def prepare_params(conv_w, conv_b, fc_w, fc_b):
    """Weight re-layout hoisted out of the per-call forward (fixed weights)."""
    # conv weight (COUT, CIN, KH, KW) -> (COUT, KH, KW, CIN) -> (F, KK);
    # column order (kh, kw, cin) matches the patch row order below.
    cw = jnp.transpose(conv_w, (0, 2, 3, 1)).reshape(NUM_FEATURES, KK)
    cw = cw.astype(jnp.bfloat16)
    cb = conv_b.reshape(NUM_FEATURES, 1).astype(jnp.float32)
    # fc weight / bias, classes zero-padded to a full 128-lane group.
    fw = jnp.zeros((NUM_FEATURES, C_PAD), jnp.float32)
    fw = fw.at[:, :NUM_CLASSES].set(fc_w.T).astype(jnp.bfloat16)
    fb = jnp.zeros((1, C_PAD), jnp.float32).at[:, :NUM_CLASSES].set(fc_b)
    return cw, cb, fw, fb


# ------------------------------- wrapper ------------------------------------
@jax.jit
def chest_classifier_forward(x_nchw, cw, cb, fw, fb):
    """x_nchw: (N, CIN, H, W) f32 (PyTorch layout). Returns (N, NUM_CLASSES)."""
    # 'same' padding, channels-first slicing: the transposed im2col matrix
    # (KK, M) needs only one pad + one transpose + 9 static slices + 1 concat.
    x_pad = jnp.pad(x_nchw, ((0, 0), (0, 0), (1, 1), (1, 1)))    # (N, CIN, HP, WP)
    x_cf = jnp.transpose(x_pad, (1, 0, 2, 3))                    # (CIN, N, HP, WP)
    taps = [x_cf[:, :, kh:kh + H, kw:kw + W].reshape(CIN, M)
            for kh in range(KH) for kw in range(KW)]             # each (CIN, M)
    patchesT = jnp.concatenate(taps, axis=0).astype(jnp.bfloat16)  # (KK, M)

    out = pl.pallas_call(
        chest_kernel,
        out_shape=jax.ShapeDtypeStruct((N_PAD, C_PAD), jnp.float32),
        in_specs=[_VMEM_SPEC] * 6,
        out_specs=_VMEM_SPEC,
        cost_estimate=_COST,
    )(patchesT, cw, cb, POOL, fw, fb)
    # TODO(synk): if batch/spatial ever scales, add a grid over M-tiles of
    # patchesT with dimension_semantics=("parallel",) to engage v7x's 2nd TC.

    return out[:N, :NUM_CLASSES]


# ---------------------------- pure-JAX reference -----------------------------
def reference_forward(x_nchw, conv_w, conv_b, fc_w, fc_b):
    y = lax.conv_general_dilated(
        x_nchw, conv_w, window_strides=(1, 1), padding=((1, 1), (1, 1)),
        dimension_numbers=("NCHW", "OIHW", "NCHW"))
    y = y + conv_b.reshape(1, NUM_FEATURES, 1, 1)
    y = jnp.maximum(y, 0.0)
    pooled = jnp.mean(y, axis=(2, 3))                            # (N, NUM_FEATURES)
    return pooled @ fc_w.T + fc_b                                # (N, NUM_CLASSES)


# ---------------------------------- main -------------------------------------
if __name__ == "__main__":
    key = jax.random.PRNGKey(0)
    k_x, k_cw, k_cb, k_fw, k_fb = jax.random.split(key, 5)

    x = jax.random.normal(k_x, (N, CIN, H, W), jnp.float32)
    conv_w = 0.1 * jax.random.normal(k_cw, (NUM_FEATURES, CIN, KH, KW),
                                     jnp.float32)
    conv_b = 0.1 * jax.random.normal(k_cb, (NUM_FEATURES,), jnp.float32)
    fc_w = 0.1 * jax.random.normal(k_fw, (NUM_CLASSES, NUM_FEATURES),
                                   jnp.float32)
    fc_b = 0.1 * jax.random.normal(k_fb, (NUM_CLASSES,), jnp.float32)

    # Static weight re-layout done once, outside the per-call jit.
    cw, cb, fw, fb = prepare_params(conv_w, conv_b, fc_w, fc_b)

    logits = chest_classifier_forward(x, cw, cb, fw, fb)
    logits = jax.block_until_ready(logits)

    ref = reference_forward(x, conv_w, conv_b, fc_w, fc_b)
    assert logits.shape == (N, NUM_CLASSES)
    # bf16 matmul operands (f32 accumulate) -> loosened tolerance vs f32 ref.
    assert jnp.allclose(logits, ref, atol=3e-2, rtol=3e-2), (
        f"mismatch: max abs err {jnp.max(jnp.abs(logits - ref))}")

    print("KERNEL_OK")
</pallas_src>

<mosaic_0001>
module attributes {stable_mosaic.version = 11 : i64} {
  func.func @chest_kernel(%arg0: memref<36x512xbf16, #tpu.memory_space<vmem>>, %arg1: memref<32x36xbf16, #tpu.memory_space<vmem>>, %arg2: memref<32x1xf32, #tpu.memory_space<vmem>>, %arg3: memref<8x512xbf16, #tpu.memory_space<vmem>>, %arg4: memref<32x128xbf16, #tpu.memory_space<vmem>>, %arg5: memref<1x128xf32, #tpu.memory_space<vmem>>, %arg6: memref<8x128xf32, #tpu.memory_space<vmem>>) attributes {dimension_semantics = [], scalar_prefetch = 0 : i64, scratch_operands = 0 : i64, tpu.core_type = #tpu.core_type<tc>} {
    %c0 = arith.constant 0 : index
    %c0_0 = arith.constant 0 : index
    %0 = vector.load %arg1[%c0, %c0_0] : memref<32x36xbf16, #tpu.memory_space<vmem>>, vector<32x36xbf16>
    %c0_1 = arith.constant 0 : index
    %c0_2 = arith.constant 0 : index
    %1 = vector.load %arg0[%c0_1, %c0_2] : memref<36x512xbf16, #tpu.memory_space<vmem>>, vector<36x512xbf16>
    %cst = arith.constant dense<0.000000e+00> : vector<32x512xf32>
    %2 = tpu.matmul %0, %1, %cst {dimension_numbers = #tpu.dot_dimension_numbers<[1], [0], [0], [1], [0, 0, 1, 1], [], []>} : vector<32x36xbf16>, vector<36x512xbf16>, vector<32x512xf32> -> vector<32x512xf32>
    %c0_3 = arith.constant 0 : index
    %c0_4 = arith.constant 0 : index
    %3 = vector.load %arg2[%c0_3, %c0_4] : memref<32x1xf32, #tpu.memory_space<vmem>>, vector<32x1xf32>
    %4 = vector.broadcast %3 : vector<32x1xf32> to vector<32x512xf32>
    %5 = arith.addf %2, %4 : vector<32x512xf32>
    %cst_5 = arith.constant 0.000000e+00 : f32
    %6 = vector.broadcast %cst_5 : f32 to vector<32x512xf32>
    %7 = arith.maximumf %5, %6 : vector<32x512xf32>
    %c0_6 = arith.constant 0 : index
    %c0_7 = arith.constant 0 : index
    %8 = vector.load %arg3[%c0_6, %c0_7] : memref<8x512xbf16, #tpu.memory_space<vmem>>, vector<8x512xbf16>
    %9 = arith.truncf %7 : vector<32x512xf32> to vector<32x512xbf16>
    %cst_8 = arith.constant dense<0.000000e+00> : vector<8x32xf32>
    %10 = tpu.matmul %8, %9, %cst_8 {dimension_numbers = #tpu.dot_dimension_numbers<[1], [1], [0], [0], [0, 0, 1, 0], [], []>} : vector<8x512xbf16>, vector<32x512xbf16>, vector<8x32xf32> -> vector<8x32xf32>
    %11 = arith.truncf %10 : vector<8x32xf32> to vector<8x32xbf16>
    %c0_9 = arith.constant 0 : index
    %c0_10 = arith.constant 0 : index
    %12 = vector.load %arg4[%c0_9, %c0_10] : memref<32x128xbf16, #tpu.memory_space<vmem>>, vector<32x128xbf16>
    %cst_11 = arith.constant dense<0.000000e+00> : vector<8x128xf32>
    %13 = tpu.matmul %11, %12, %cst_11 {dimension_numbers = #tpu.dot_dimension_numbers<[1], [0], [0], [1], [0, 0, 1, 1], [], []>} : vector<8x32xbf16>, vector<32x128xbf16>, vector<8x128xf32> -> vector<8x128xf32>
    %c0_12 = arith.constant 0 : index
    %c0_13 = arith.constant 0 : index
    %14 = vector.load %arg5[%c0_12, %c0_13] : memref<1x128xf32, #tpu.memory_space<vmem>>, vector<1x128xf32>
    %15 = vector.broadcast %14 : vector<1x128xf32> to vector<8x128xf32>
    %16 = arith.addf %13, %15 : vector<8x128xf32>
    %c0_14 = arith.constant 0 : index
    %c0_15 = arith.constant 0 : index
    %17 = vector.load %arg6[%c0_14, %c0_15] : memref<8x128xf32, #tpu.memory_space<vmem>>, vector<8x128xf32>
    tpu.vector_store %arg6[%c0_14, %c0_15], %16 {strides = array<i32>} : memref<8x128xf32, #tpu.memory_space<vmem>>, vector<8x128xf32>,
    return
  }
}

</mosaic_0001>

<llo_original>
// kernel: chest_classifier_forward.1
$region0: #{chest_classifier_forward.1}
  #allocation0 [shape = 'u32[]', space=smem, size = 0x4, offset = 0x4, fixed_abs, tag = 'smem constant byte address 0x4 - core index']
  #allocation1 [shape = 'u32[144,128]{1,0:T(1,128)}', space=vmem, size = 0x12000, scoped, tag = 'internal scratch']
  %s0 = inlined_call_operand.vmem [shape: bf16[36,512], index: 0, kind: input, shape index: {}]
  %s1 = inlined_call_operand.vmem [shape: bf16[32,36], index: 1, kind: input, shape index: {}]
  %s2 = inlined_call_operand.vmem [shape: f32[32,1], index: 2, kind: input, shape index: {}]
  %s3 = inlined_call_operand.vmem [shape: bf16[8,512], index: 3, kind: input, shape index: {}]
  %s4 = inlined_call_operand.vmem [shape: bf16[32,128], index: 4, kind: input, shape index: {}]
  %s5 = inlined_call_operand.vmem [shape: f32[1,128], index: 5, kind: input, shape index: {}]
  %s6 = inlined_call_operand.vmem [shape: f32[8,128], index: 6, kind: output, shape index: {}]
  %s7 = sld [smem:[#allocation0]]
  $region34: #{chest_classifier_forward.1} parent=0
    _
  %s9 = ssub.s32 1, %s7
  %s10 = scalar_select 0, %s9, %s7
  // Predicated region
  $region2: #{chest_classifier_forward.1} parent=0 // pred_check
    _
  $region3: #{chest_classifier_forward.1} parent=0 // pred_check_branch
    %12 = sbr.rel (0) target = $region5
  $region4: #{chest_classifier_forward.1} parent=0 // pred_region
    _
  $region5: #{chest_classifier_forward.1} parent=0 // pred_fallthru
    _
  // Predicated region
  $region6: #{chest_classifier_forward.1} parent=0 // pred_check
    _
  $region7: #{chest_classifier_forward.1} parent=0 // pred_check_branch
    %14 = sbr.rel (0) target = $region9
  $region8: #{chest_classifier_forward.1} parent=0 // pred_region
    _
  $region9: #{chest_classifier_forward.1} parent=0 // pred_fallthru
    _
  // Predicated region
  $region10: #{chest_classifier_forward.1} parent=0 // pred_check
    _
  $region11: #{chest_classifier_forward.1} parent=0 // pred_check_branch
    %16 = sbr.rel (0) target = $region13
  $region12: #{chest_classifier_forward.1} parent=0 // pred_region
    _
  $region13: #{chest_classifier_forward.1} parent=0 // pred_fallthru
    _
  // Predicated region
  $region14: #{chest_classifier_forward.1} parent=0 // pred_check
    _
  $region15: #{chest_classifier_forward.1} parent=0 // pred_check_branch
    %18 = sbr.rel (0) target = $region17
  $region16: #{chest_classifier_forward.1} parent=0 // pred_region
    _
  $region17: #{chest_classifier_forward.1} parent=0 // pred_fallthru
    _
  // Predicated region
  $region18: #{chest_classifier_forward.1} parent=0 // pred_check
    _
  $region19: #{chest_classifier_forward.1} parent=0 // pred_check_branch
    %20 = sbr.rel (0) target = $region21
  $region20: #{chest_classifier_forward.1} parent=0 // pred_region
    _
  $region21: #{chest_classifier_forward.1} parent=0 // pred_fallthru
    _
  // Predicated region
  $region22: #{chest_classifier_forward.1} parent=0 // pred_check
    _
  $region23: #{chest_classifier_forward.1} parent=0 // pred_check_branch
    %22 = sbr.rel (0) target = $region25
  $region24: #{chest_classifier_forward.1} parent=0 // pred_region
    _
  $region25: #{chest_classifier_forward.1} parent=0 // pred_fallthru
    _
  %v24 = vld [vmem:[%s1] sm:$0xf]
  %v25 = vld [vmem:[%s1 + $0x4] sm:$0xf]
  %v26 = vld [vmem:[%s1 + $0x8] sm:$0xf]
  %v27 = vld [vmem:[%s1 + $0xc] sm:$0xf]
  %v28 = vld [vmem:[%s0] sm:$0xff]
  %v29 = vld [vmem:[%s0 + $0x8] sm:$0xff]
  %v30 = vld [vmem:[%s0 + $0x10] sm:$0xff]
  %v31 = vld [vmem:[%s0 + $0x18] sm:$0xff]
  %v32 = vld [vmem:[%s0 + $0x20] sm:$0xff]
  %v33 = vld [vmem:[%s0 + $0x28] sm:$0xff]
  %v34 = vld [vmem:[%s0 + $0x30] sm:$0xff]
  %v35 = vld [vmem:[%s0 + $0x38] sm:$0xff]
  %v36 = vld [vmem:[%s0 + $0x40] sm:$0x33]
  %v37 = vld [vmem:[%s0 + $0x48] sm:$0x33]
  %v38 = vld [vmem:[%s2] sm:$0xff]
  %v39 = vld [vmem:[%s2 + $0x8] sm:$0xff]
  %v40 = vld [vmem:[%s2 + $0x10] sm:$0xff]
  %v41 = vld [vmem:[%s2 + $0x18] sm:$0xff]
  %43 = vset.pattern.permute.xlu0 0
  %44 = vperm.xlu0 %43, %v38
  %v45 = vpop.permute.xlu0 %44
  %48 = vset.pattern.permute.xlu0 0
  %49 = vperm.xlu0 %48, %v39
  %v50 = vpop.permute.xlu0 %49
  %53 = vset.pattern.permute.xlu0 0
  %54 = vperm.xlu0 %53, %v40
  %v55 = vpop.permute.xlu0 %54
  %58 = vset.pattern.permute.xlu0 0
  %59 = vperm.xlu0 %58, %v41
  %v60 = vpop.permute.xlu0 %59
  %v66 = vunpack.c.l.b16 %v24
  %v67 = vunpack.c.l.b16 %v25
  %v68 = vunpack.c.l.b16 %v26
  %v69 = vunpack.c.l.b16 %v27
  %v70 = vpack.c.b16 %v67, %v66
  %v71 = vpack.c.b16 %v69, %v68
  %v82 = vunpack.c.l.b16 %v28
  %v83 = vunpack.c.h.b16 %v28
  %v84 = vunpack.c.l.b16 %v29
  %v85 = vunpack.c.h.b16 %v29
  %v86 = vunpack.c.l.b16 %v30
  %v87 = vunpack.c.h.b16 %v30
  %v88 = vunpack.c.l.b16 %v31
  %v89 = vunpack.c.h.b16 %v31
  %v90 = vunpack.c.l.b16 %v32
  %v91 = vunpack.c.h.b16 %v32
  %v92 = vunpack.c.l.b16 %v33
  %v93 = vunpack.c.h.b16 %v33
  %v94 = vunpack.c.l.b16 %v34
  %v95 = vunpack.c.h.b16 %v34
  %v96 = vunpack.c.l.b16 %v35
  %v97 = vunpack.c.h.b16 %v35
  %v98 = vunpack.c.l.b16 %v36
  %v99 = vunpack.c.h.b16 %v36
  %v100 = vunpack.c.l.b16 %v37
  %v101 = vunpack.c.h.b16 %v37
  %v102 = vpack.c.b16 %v86, %v82
  %v103 = vpack.c.b16 %v87, %v83
  %v104 = vpack.c.b16 %v88, %v84
  %v105 = vpack.c.b16 %v89, %v85
  %v106 = vpack.c.b16 %v94, %v90
  %v107 = vpack.c.b16 %v95, %v91
  %v108 = vpack.c.b16 %v96, %v92
  %v109 = vpack.c.b16 %v97, %v93
  %v110 = vpack.c.b16 %v98, %v98
  %v111 = vpack.c.b16 %v99, %v99
  %v112 = vpack.c.b16 %v100, %v100
  %v113 = vpack.c.b16 %v101, %v101
  %vm122 = vcmask 293888
  %v124 = vsel %vm122, %v70, 0
  %v127 = vsel %vm122, %v71, 0
  %vm129 = vcmask 1041408
  %v131 = vsel %vm129, %v110, 0
  %v134 = vsel %vm129, %v111, 0
  %v137 = vsel %vm129, %v112, 0
  %v140 = vsel %vm129, %v113, 0
  %142 = vmatprep.subr.bf16.mxu0 %v103
  %143 = vmatpush1.bf16.msra.mxu0 %v102
  %144 = vmatprep.subr.bf16.mxu0 %v107
  %145 = vmatpush1.bf16.msra.mxu0 %v106
  %146 = vmatprep.subr.bf16.mxu0 %v134
  %147 = vmatpush1.bf16.msra.mxu0 %v131
  %148 = vmatprep.subr.bf16.mxu0 0
  %149 = vmatpush1.bf16.msra.mxu0 0
  %150 = vmatprep.subr.bf16.mxu0 0
  %151 = vmatpush1.bf16.msra.mxu0 0
  %152 = vmatprep.subr.bf16.mxu0 0
  %153 = vmatpush1.bf16.msra.mxu0 0
  %154 = vmatprep.subr.bf16.mxu0 0
  %155 = vmatpush1.bf16.msra.mxu0 0
  %156 = vmatprep.subr.bf16.mxu0 0
  %157 = vmatpush1.bf16.msra.mxu0 0
  %158 = vmatprep.subr.bf16.mxu0 0
  %159 = vmatpush1.bf16.msra.mxu0 0
  %160 = vmatprep.subr.bf16.mxu0 0
  %161 = vmatpush1.bf16.msra.mxu0 0
  %162 = vmatprep.subr.bf16.mxu0 0
  %163 = vmatpush1.bf16.msra.mxu0 0
  %164 = vmatprep.subr.bf16.mxu0 0
  %165 = vmatpush1.bf16.msra.mxu0 0
  %166 = vmatprep.subr.bf16.mxu0 0
  %167 = vmatpush1.bf16.msra.mxu0 0
  %168 = vmatprep.subr.bf16.mxu0 0
  %169 = vmatpush1.bf16.msra.mxu0 0
  %170 = vmatprep.subr.bf16.mxu0 0
  %171 = vmatpush1.bf16.msra.mxu0 0
  %172 = vmatprep.subr.bf16.mxu0 0
  %173 = vmatpush1.bf16.msra.mxu0 0
  %174 = vmatprep.mubr.bf16.mxu0 0
  %175 = vmatmul.mubr.bf16.gmra.mrb[0].mxu0 %v124
  %v176 = vpop.f32.mrb[0].mxu0
  %v177 = vadd.f32 %v45, %v176
  %v178 = vpop.f32.mrb[0].mxu0
  %v179 = vadd.f32 %v45, %v178
  %v180 = vpop.f32.mrb[0].mxu0
  %v181 = vadd.f32 %v50, %v180
  %v182 = vpop.f32.mrb[0].mxu0
  %v183 = vadd.f32 %v50, %v182
  %184 = vmatprep.mubr.bf16.mxu0 0
  %185 = vmatmul.mubr.bf16.gmra.mrb[0].mxu0 %v127
  %v186 = vpop.f32.mrb[0].mxu0
  %v187 = vadd.f32 %v55, %v186
  %v188 = vpop.f32.mrb[0].mxu0
  %v189 = vadd.f32 %v55, %v188
  %v190 = vpop.f32.mrb[0].mxu0
  %v191 = vadd.f32 %v60, %v190
  %v192 = vpop.f32.mrb[0].mxu0
  %v193 = vadd.f32 %v60, %v192
  %194 = vdwg.mxu0
  %195 = vmatprep.subr.bf16.mxu0 %v105
  %196 = vmatpush1.bf16.msra.mxu0 %v104
  %197 = vmatprep.subr.bf16.mxu0 %v109
  %198 = vmatpush1.bf16.msra.mxu0 %v108
  %199 = vmatprep.subr.bf16.mxu0 %v140
  %200 = vmatpush1.bf16.msra.mxu0 %v137
  %201 = vmatprep.subr.bf16.mxu0 0
  %202 = vmatpush1.bf16.msra.mxu0 0
  %203 = vmatprep.subr.bf16.mxu0 0
  %204 = vmatpush1.bf16.msra.mxu0 0
  %205 = vmatprep.subr.bf16.mxu0 0
  %206 = vmatpush1.bf16.msra.mxu0 0
  %207 = vmatprep.subr.bf16.mxu0 0
  %208 = vmatpush1.bf16.msra.mxu0 0
  %209 = vmatprep.subr.bf16.mxu0 0
  %210 = vmatpush1.bf16.msra.mxu0 0
  %211 = vmatprep.subr.bf16.mxu0 0
  %212 = vmatpush1.bf16.msra.mxu0 0
  %213 = vmatprep.subr.bf16.mxu0 0
  %214 = vmatpush1.bf16.msra.mxu0 0
  %215 = vmatprep.subr.bf16.mxu0 0
  %216 = vmatpush1.bf16.msra.mxu0 0
  %217 = vmatprep.subr.bf16.mxu0 0
  %218 = vmatpush1.bf16.msra.mxu0 0
  %219 = vmatprep.subr.bf16.mxu0 0
  %220 = vmatpush1.bf16.msra.mxu0 0
  %221 = vmatprep.subr.bf16.mxu0 0
  %222 = vmatpush1.bf16.msra.mxu0 0
  %223 = vmatprep.subr.bf16.mxu0 0
  %224 = vmatpush1.bf16.msra.mxu0 0
  %225 = vmatprep.subr.bf16.mxu0 0
  %226 = vmatpush1.bf16.msra.mxu0 0
  %227 = vmatprep.mubr.bf16.mxu0 0
  %228 = vmatmul.mubr.bf16.gmra.mrb[0].mxu0 %v124
  %v229 = vpop.f32.mrb[0].mxu0
  %v230 = vadd.f32 %v45, %v229
  %v231 = vpop.f32.mrb[0].mxu0
  %v232 = vadd.f32 %v45, %v231
  %v233 = vpop.f32.mrb[0].mxu0
  %v234 = vadd.f32 %v50, %v233
  %v235 = vpop.f32.mrb[0].mxu0
  %v236 = vadd.f32 %v50, %v235
  %237 = vmatprep.mubr.bf16.mxu0 0
  %238 = vmatmul.mubr.bf16.gmra.mrb[0].mxu0 %v127
  %v239 = vpop.f32.mrb[0].mxu0
  %v240 = vadd.f32 %v55, %v239
  %v241 = vpop.f32.mrb[0].mxu0
  %v242 = vadd.f32 %v55, %v241
  %v243 = vpop.f32.mrb[0].mxu0
  %v244 = vadd.f32 %v60, %v243
  %v245 = vpop.f32.mrb[0].mxu0
  %v246 = vadd.f32 %v60, %v245
  %247 = vdwg.mxu0
  %v248 = vmax.f32 %v177, 0.0
  %v249 = vmax.f32 %v179, 0.0
  %v250 = vmax.f32 %v230, 0.0
  %v251 = vmax.f32 %v232, 0.0
  %v252 = vmax.f32 %v181, 0.0
  %v253 = vmax.f32 %v183, 0.0
  %v254 = vmax.f32 %v234, 0.0
  %v255 = vmax.f32 %v236, 0.0
  %v256 = vmax.f32 %v187, 0.0
  %v257 = vmax.f32 %v189, 0.0
  %v258 = vmax.f32 %v240, 0.0
  %v259 = vmax.f32 %v242, 0.0
  %v260 = vmax.f32 %v191, 0.0
  %v261 = vmax.f32 %v193, 0.0
  %v262 = vmax.f32 %v244, 0.0
  %v263 = vmax.f32 %v246, 0.0
  %v264 = vld [vmem:[%s3] sm:$0xff]
  %v265 = vld [vmem:[%s3 + $0x8] sm:$0xff]
  %v266 = vpack.c.bf16 %v252, %v248
  %v267 = vpack.c.bf16 %v253, %v249
  %v268 = vpack.c.bf16 %v254, %v250
  %v269 = vpack.c.bf16 %v255, %v251
  %v270 = vpack.c.bf16 %v260, %v256
  %v271 = vpack.c.bf16 %v261, %v257
  %v272 = vpack.c.bf16 %v262, %v258
  %v273 = vpack.c.bf16 %v263, %v259
  %v276 = vunpack.c.l.b16 %v264
  %v277 = vunpack.c.h.b16 %v264
  %v278 = vunpack.c.l.b16 %v265
  %v279 = vunpack.c.h.b16 %v265
  %v280 = vpack.c.b16 %v276, %v276
  %v281 = vpack.c.b16 %v277, %v277
  %v282 = vpack.c.b16 %v278, %v278
  %v283 = vpack.c.b16 %v279, %v279
  %288 = vmatprep.subr.bf16.mxu0 %v267
  %289 = vmatpush1.bf16.xpose.msra.mxu0 %v266
  %290 = vmatprep.subr.bf16.mxu0 %v271
  %291 = vmatpush1.bf16.xpose.msra.mxu0 %v270
  %292 = vmatprep.subr.bf16.mxu0 0
  %293 = vmatpush1.bf16.xpose.msra.mxu0 0
  %294 = vmatprep.subr.bf16.mxu0 0
  %295 = vmatpush1.bf16.xpose.msra.mxu0 0
  %296 = vmatprep.subr.bf16.mxu0 0
  %297 = vmatpush1.bf16.xpose.msra.mxu0 0
  %298 = vmatprep.subr.bf16.mxu0 0
  %299 = vmatpush1.bf16.xpose.msra.mxu0 0
  %300 = vmatprep.subr.bf16.mxu0 0
  %301 = vmatpush1.bf16.xpose.msra.mxu0 0
  %302 = vmatprep.subr.bf16.mxu0 0
  %303 = vmatpush1.bf16.xpose.msra.mxu0 0
  %304 = vmatprep.subr.bf16.mxu0 0
  %305 = vmatpush1.bf16.xpose.msra.mxu0 0
  %306 = vmatprep.subr.bf16.mxu0 0
  %307 = vmatpush1.bf16.xpose.msra.mxu0 0
  %308 = vmatprep.subr.bf16.mxu0 0
  %309 = vmatpush1.bf16.xpose.msra.mxu0 0
  %310 = vmatprep.subr.bf16.mxu0 0
  %311 = vmatpush1.bf16.xpose.msra.mxu0 0
  %312 = vmatprep.subr.bf16.mxu0 0
  %313 = vmatpush1.bf16.xpose.msra.mxu0 0
  %314 = vmatprep.subr.bf16.mxu0 0
  %315 = vmatpush1.bf16.xpose.msra.mxu0 0
  %316 = vmatprep.subr.bf16.mxu0 0
  %317 = vmatpush1.bf16.xpose.msra.mxu0 0
  %318 = vmatprep.subr.bf16.mxu0 0
  %319 = vmatpush1.bf16.xpose.msra.mxu0 0
  %320 = vmatprep.mubr.bf16.mxu0 %v281
  %321 = vmatmul.mubr.bf16.gmra.mrb[0].mxu0 %v280
  %v322 = vpop.f32.mrb[0].mxu0
  %v323 = vadd.f32 0.0, %v322
  %v324 = vpop.f32.mrb[0].mxu0
  %v325 = vpop.f32.mrb[0].mxu0
  %v326 = vpop.f32.mrb[0].mxu0
  %327 = vdwg.mxu0
  %328 = vmatprep.subr.bf16.mxu0 %v269
  %329 = vmatpush1.bf16.xpose.msra.mxu0 %v268
  %330 = vmatprep.subr.bf16.mxu0 %v273
  %331 = vmatpush1.bf16.xpose.msra.mxu0 %v272
  %332 = vmatprep.subr.bf16.mxu0 0
  %333 = vmatpush1.bf16.xpose.msra.mxu0 0
  %334 = vmatprep.subr.bf16.mxu0 0
  %335 = vmatpush1.bf16.xpose.msra.mxu0 0
  %336 = vmatprep.subr.bf16.mxu0 0
  %337 = vmatpush1.bf16.xpose.msra.mxu0 0
  %338 = vmatprep.subr.bf16.mxu0 0
  %339 = vmatpush1.bf16.xpose.msra.mxu0 0
  %340 = vmatprep.subr.bf16.mxu0 0
  %341 = vmatpush1.bf16.xpose.msra.mxu0 0
  %342 = vmatprep.subr.bf16.mxu0 0
  %343 = vmatpush1.bf16.xpose.msra.mxu0 0
  %344 = vmatprep.subr.bf16.mxu0 0
  %345 = vmatpush1.bf16.xpose.msra.mxu0 0
  %346 = vmatprep.subr.bf16.mxu0 0
  %347 = vmatpush1.bf16.xpose.msra.mxu0 0
  %348 = vmatprep.subr.bf16.mxu0 0
  %349 = vmatpush1.bf16.xpose.msra.mxu0 0
  %350 = vmatprep.subr.bf16.mxu0 0
  %351 = vmatpush1.bf16.xpose.msra.mxu0 0
  %352 = vmatprep.subr.bf16.mxu0 0
  %353 = vmatpush1.bf16.xpose.msra.mxu0 0
  %354 = vmatprep.subr.bf16.mxu0 0
  %355 = vmatpush1.bf16.xpose.msra.mxu0 0
  %356 = vmatprep.subr.bf16.mxu0 0
  %357 = vmatpush1.bf16.xpose.msra.mxu0 0
  %358 = vmatprep.subr.bf16.mxu0 0
  %359 = vmatpush1.bf16.xpose.msra.mxu0 0
  %360 = vmatprep.mubr.bf16.mxu0 %v283
  %361 = vmatmul.mubr.bf16.gmra.mrb[0].mxu0 %v282
  %v362 = vpop.f32.mrb[0].mxu0
  %v363 = vadd.f32 %v323, %v362
  %v364 = vpop.f32.mrb[0].mxu0
  %v365 = vpop.f32.mrb[0].mxu0
  %v366 = vpop.f32.mrb[0].mxu0
  %367 = vdwg.mxu0
  %v368 = vpack.c.bf16 %v363, %v363
  %v369 = vld [vmem:[%s4] sm:$0xf]
  %v370 = vld [vmem:[%s4 + $0x4] sm:$0xf]
  %v371 = vld [vmem:[%s4 + $0x8] sm:$0xf]
  %v372 = vld [vmem:[%s4 + $0xc] sm:$0xf]
  %v373 = vld [vmem:[%s5] sm:$0x1]
  %v375 = vlaneseq
  %v376 = vshrl.u32 %v375, 7
  %v377 = vsub.s32 0, %v376
  %v378 = vrot.slane %v373, %v377
  %v384 = vunpack.c.l.b16 %v369
  %v385 = vunpack.c.l.b16 %v370
  %v386 = vunpack.c.l.b16 %v371
  %v387 = vunpack.c.l.b16 %v372
  %v388 = vpack.c.b16 %v385, %v384
  %v389 = vpack.c.b16 %v387, %v386
  %vm392 = vcmask 261120
  %v394 = vsel %vm392, %v368, 0
  %396 = vmatprep.subr.bf16.mxu0 0
  %397 = vmatpush1.bf16.msra.mxu0 %v388
  %398 = vmatprep.subr.bf16.mxu0 0
  %399 = vmatpush1.bf16.msra.mxu0 %v389
  %400 = vmatprep.subr.bf16.mxu0 0
  %401 = vmatpush1.bf16.msra.mxu0 0
  %402 = vmatprep.subr.bf16.mxu0 0
  %403 = vmatpush1.bf16.msra.mxu0 0
  %404 = vmatprep.subr.bf16.mxu0 0
  %405 = vmatpush1.bf16.msra.mxu0 0
  %406 = vmatprep.subr.bf16.mxu0 0
  %407 = vmatpush1.bf16.msra.mxu0 0
  %408 = vmatprep.subr.bf16.mxu0 0
  %409 = vmatpush1.bf16.msra.mxu0 0
  %410 = vmatprep.subr.bf16.mxu0 0
  %411 = vmatpush1.bf16.msra.mxu0 0
  %412 = vmatprep.subr.bf16.mxu0 0
  %413 = vmatpush1.bf16.msra.mxu0 0
  %414 = vmatprep.subr.bf16.mxu0 0
  %415 = vmatpush1.bf16.msra.mxu0 0
  %416 = vmatprep.subr.bf16.mxu0 0
  %417 = vmatpush1.bf16.msra.mxu0 0
  %418 = vmatprep.subr.bf16.mxu0 0
  %419 = vmatpush1.bf16.msra.mxu0 0
  %420 = vmatprep.subr.bf16.mxu0 0
  %421 = vmatpush1.bf16.msra.mxu0 0
  %422 = vmatprep.subr.bf16.mxu0 0
  %423 = vmatpush1.bf16.msra.mxu0 0
  %424 = vmatprep.subr.bf16.mxu0 0
  %425 = vmatpush1.bf16.msra.mxu0 0
  %426 = vmatprep.subr.bf16.mxu0 0
  %427 = vmatpush1.bf16.msra.mxu0 0
  %428 = vmatprep.mubr.bf16.mxu0 0
  %429 = vmatmul.mubr.bf16.gmra.mrb[0].mxu0 %v394
  %v430 = vpop.f32.mrb[0].mxu0
  %v431 = vadd.f32 %v378, %v430
  %v432 = vpop.f32.mrb[0].mxu0
  %v433 = vpop.f32.mrb[0].mxu0
  %v434 = vpop.f32.mrb[0].mxu0
  %435 = vdwg.mxu0
  %436 = vst [vmem:[%s6] sm:$0xff] %v431
  // Predicated region
  $region26: #{chest_classifier_forward.1} parent=0 // pred_check
    _
  $region27: #{chest_classifier_forward.1} parent=0 // pred_check_branch
    %438 = sbr.rel (0) target = $region29
  $region28: #{chest_classifier_forward.1} parent=0 // pred_region
    _
  $region29: #{chest_classifier_forward.1} parent=0 // pred_fallthru
    _
  // Predicated region
  $region30: #{chest_classifier_forward.1} parent=0 // pred_check
    _
  $region31: #{chest_classifier_forward.1} parent=0 // pred_check_branch
    %440 = sbr.rel (0) target = $region33
  $region32: #{chest_classifier_forward.1} parent=0 // pred_region
    _
  $region33: #{chest_classifier_forward.1} parent=0 // pred_fallthru
    _

</llo_original>
